<compile_context>
chip_gen: v5e
topology: v5e:2x2
jax: 0.10.0
libtpu: 0.0.40
codegen_flags: <defaults>
</compile_context>

<pallas_src>
import functools
import math

import jax
import jax.numpy as jnp
from jax import lax
from jax.experimental import pallas as pl
from jax.experimental.pallas import tpu as pltpu

NEG_INF = -1e18
LN_EPS = 1e-6
ROW_TILE = 256  # rows per grid step for the token-flattened kernels


def _round_up(x, m):
    return ((x + m - 1) // m) * m


# ------------------------------ Pallas kernels ------------------------------

def _linear_kernel(x_ref, w_ref, b_ref, o_ref):
    # x: (tm, K), w: (K, N), b: (1, N) -> o: (tm, N)
    o_ref[...] = (jnp.dot(x_ref[...], w_ref[...], preferred_element_type=jnp.float32)
                  + b_ref[...]).astype(o_ref.dtype)


def _add_ln_kernel(x_ref, r_ref, g_ref, b_ref, o_ref):
    # LayerNorm(x + residual)
    h = x_ref[...] + r_ref[...]
    mu = jnp.mean(h, axis=-1, keepdims=True)
    var = jnp.mean(jnp.square(h - mu), axis=-1, keepdims=True)
    o_ref[...] = (((h - mu) * lax.rsqrt(var + LN_EPS)) * g_ref[...]
                  + b_ref[...]).astype(o_ref.dtype)


def _ffn_kernel(x_ref, g_ref, be_ref, w1_ref, b1_ref, w2_ref, b2_ref, o_ref):
    # x + W2(relu(W1(LN(x)))) fully fused per row tile.
    x = x_ref[...]
    mu = jnp.mean(x, axis=-1, keepdims=True)
    var = jnp.mean(jnp.square(x - mu), axis=-1, keepdims=True)
    h = ((x - mu) * lax.rsqrt(var + LN_EPS)) * g_ref[...] + be_ref[...]
    inter = jnp.maximum(
        jnp.dot(h, w1_ref[...], preferred_element_type=jnp.float32) + b1_ref[...], 0.0)
    out = jnp.dot(inter, w2_ref[...], preferred_element_type=jnp.float32) + b2_ref[...]
    o_ref[...] = (out + x).astype(o_ref.dtype)


def _attn_kernel(q_ref, k_ref, v_ref, m_ref, ctx_ref, attn_ref, *, scale):
    # One (batch, head) tile: q (Tq, dk), k (Tk, dk), v (Tk, dv), additive mask (Tq, Tk).
    q = q_ref[0, 0, :, :] * scale
    k = k_ref[0, 0, :, :]
    v = v_ref[0, 0, :, :]
    s = lax.dot_general(q, k, (((1,), (1,)), ((), ())),
                        preferred_element_type=jnp.float32) + m_ref[0, :, :]
    s_max = jnp.max(s, axis=-1, keepdims=True)
    p = jnp.exp(s - s_max)
    p = p / jnp.sum(p, axis=-1, keepdims=True)
    ctx_ref[0, 0, :, :] = jnp.dot(p, v, preferred_element_type=jnp.float32).astype(ctx_ref.dtype)
    attn_ref[0, 0, :, :] = p.astype(attn_ref.dtype)


# ------------------------------ Pallas wrappers ------------------------------

def pallas_linear(x, w, b, tile_rows=ROW_TILE):
    """(M, K) @ (K, N) + (N,) -> (M, N) with row-tiled grid."""
    M, K = x.shape
    N = w.shape[1]
    tm = min(tile_rows, _round_up(M, 8))
    Mp = _round_up(M, tm)
    xp = jnp.pad(x, ((0, Mp - M), (0, 0))) if Mp != M else x
    out = pl.pallas_call(
        _linear_kernel,
        out_shape=jax.ShapeDtypeStruct((Mp, N), jnp.float32),
        grid=(Mp // tm,),
        in_specs=[
            pl.BlockSpec((tm, K), lambda i: (i, 0)),
            pl.BlockSpec((K, N), lambda i: (0, 0)),
            pl.BlockSpec((1, N), lambda i: (0, 0)),
        ],
        out_specs=pl.BlockSpec((tm, N), lambda i: (i, 0)),
        compiler_params=pltpu.CompilerParams(dimension_semantics=("parallel",)),
    )(xp, w, b.reshape(1, N))
    return out[:M]


def pallas_add_layernorm(x, res, gamma, beta, tile_rows=ROW_TILE):
    M, D = x.shape
    tm = min(tile_rows, _round_up(M, 8))
    Mp = _round_up(M, tm)
    xp = jnp.pad(x, ((0, Mp - M), (0, 0))) if Mp != M else x
    rp = jnp.pad(res, ((0, Mp - M), (0, 0))) if Mp != M else res
    out = pl.pallas_call(
        _add_ln_kernel,
        out_shape=jax.ShapeDtypeStruct((Mp, D), jnp.float32),
        grid=(Mp // tm,),
        in_specs=[
            pl.BlockSpec((tm, D), lambda i: (i, 0)),
            pl.BlockSpec((tm, D), lambda i: (i, 0)),
            pl.BlockSpec((1, D), lambda i: (0, 0)),
            pl.BlockSpec((1, D), lambda i: (0, 0)),
        ],
        out_specs=pl.BlockSpec((tm, D), lambda i: (i, 0)),
        compiler_params=pltpu.CompilerParams(dimension_semantics=("parallel",)),
    )(xp, rp, gamma.reshape(1, D), beta.reshape(1, D))
    return out[:M]


def pallas_ffn(x, fp, tile_rows=ROW_TILE):
    """x + W2(relu(W1(LN(x)))) fused, row-tiled."""
    M, D = x.shape
    F = fp["w1"].shape[1]
    tm = min(tile_rows, _round_up(M, 8))
    Mp = _round_up(M, tm)
    xp = jnp.pad(x, ((0, Mp - M), (0, 0))) if Mp != M else x
    out = pl.pallas_call(
        _ffn_kernel,
        out_shape=jax.ShapeDtypeStruct((Mp, D), jnp.float32),
        grid=(Mp // tm,),
        in_specs=[
            pl.BlockSpec((tm, D), lambda i: (i, 0)),
            pl.BlockSpec((1, D), lambda i: (0, 0)),
            pl.BlockSpec((1, D), lambda i: (0, 0)),
            pl.BlockSpec((D, F), lambda i: (0, 0)),
            pl.BlockSpec((1, F), lambda i: (0, 0)),
            pl.BlockSpec((F, D), lambda i: (0, 0)),
            pl.BlockSpec((1, D), lambda i: (0, 0)),
        ],
        out_specs=pl.BlockSpec((tm, D), lambda i: (i, 0)),
        compiler_params=pltpu.CompilerParams(dimension_semantics=("parallel",)),
    )(xp, fp["ln_g"].reshape(1, D), fp["ln_b"].reshape(1, D),
      fp["w1"], fp["b1"].reshape(1, F), fp["w2"], fp["b2"].reshape(1, D))
    return out[:M]


def multi_head_attention(p, query, key, value, mask, heads, d_k, d_v):
    """query (B,Tq,D), key/value (B,Tk,D), mask (B,Tq,Tk) bool (True = masked)."""
    B, Tq, D = query.shape
    Tk = key.shape[1]
    q = pallas_linear(query.reshape(-1, D), p["wq"], p["bq"])
    k = pallas_linear(key.reshape(-1, D), p["wk"], p["bk"])
    v = pallas_linear(value.reshape(-1, D), p["wv"], p["bv"])
    q = q.reshape(B, Tq, heads, d_k).transpose(0, 2, 1, 3)
    k = k.reshape(B, Tk, heads, d_k).transpose(0, 2, 1, 3)
    v = v.reshape(B, Tk, heads, d_v).transpose(0, 2, 1, 3)
    add_mask = jnp.where(mask, NEG_INF, 0.0).astype(jnp.float32)  # (B, Tq, Tk)

    ctx, attn = pl.pallas_call(
        functools.partial(_attn_kernel, scale=1.0 / math.sqrt(d_k)),
        out_shape=(jax.ShapeDtypeStruct((B, heads, Tq, d_v), jnp.float32),
                   jax.ShapeDtypeStruct((B, heads, Tq, Tk), jnp.float32)),
        grid=(B, heads),
        in_specs=[
            pl.BlockSpec((1, 1, Tq, d_k), lambda b, h: (b, h, 0, 0)),
            pl.BlockSpec((1, 1, Tk, d_k), lambda b, h: (b, h, 0, 0)),
            pl.BlockSpec((1, 1, Tk, d_v), lambda b, h: (b, h, 0, 0)),
            pl.BlockSpec((1, Tq, Tk), lambda b, h: (b, 0, 0)),
        ],
        out_specs=(pl.BlockSpec((1, 1, Tq, d_v), lambda b, h: (b, h, 0, 0)),
                   pl.BlockSpec((1, 1, Tq, Tk), lambda b, h: (b, h, 0, 0))),
        compiler_params=pltpu.CompilerParams(dimension_semantics=("parallel", "parallel")),
    )(q, k, v, add_mask)

    ctx = ctx.transpose(0, 2, 1, 3).reshape(B * Tq, heads * d_v)
    out = pallas_linear(ctx, p["wo"], p["bo"]).reshape(B, Tq, D)
    return out, attn


# --------------------------- Decoder (forward pass) ---------------------------

def init_decoder_params(key, num_layers, d_model, heads, d_k, d_v, d_ff):
    def dense(k, fan_in, fan_out):
        kw, kb = jax.random.split(k)
        w = jax.random.normal(kw, (fan_in, fan_out), jnp.float32) / jnp.sqrt(float(fan_in))
        b = 0.01 * jax.random.normal(kb, (fan_out,), jnp.float32)
        return w, b

    def mha(k):
        ks = jax.random.split(k, 4)
        wq, bq = dense(ks[0], d_model, heads * d_k)
        wk, bk = dense(ks[1], d_model, heads * d_k)
        wv, bv = dense(ks[2], d_model, heads * d_v)
        wo, bo = dense(ks[3], heads * d_v, d_model)
        return dict(wq=wq, bq=bq, wk=wk, bk=bk, wv=wv, bv=bv, wo=wo, bo=bo)

    layers = []
    for lk in jax.random.split(key, num_layers):
        ks = jax.random.split(lk, 8)
        w1, b1 = dense(ks[2], d_model, d_ff)
        w2, b2 = dense(ks[3], d_ff, d_model)
        layers.append(dict(
            self_attn=mha(ks[0]),
            ctx_attn=mha(ks[1]),
            ln1_g=1.0 + 0.05 * jax.random.normal(ks[4], (d_model,), jnp.float32),
            ln1_b=0.01 * jax.random.normal(ks[5], (d_model,), jnp.float32),
            ln2_g=1.0 + 0.05 * jax.random.normal(ks[6], (d_model,), jnp.float32),
            ln2_b=0.01 * jax.random.normal(ks[7], (d_model,), jnp.float32),
            ffn=dict(ln_g=jnp.ones((d_model,), jnp.float32),
                     ln_b=jnp.zeros((d_model,), jnp.float32),
                     w1=w1, b1=b1, w2=w2, b2=b2),
        ))
    return dict(layers=layers, heads=heads, d_k=d_k, d_v=d_v)


def decoder_layer_forward(lp, x, memory_bank, src_pad_mask, dec_mask, heads, d_k, d_v):
    B, T, D = x.shape
    q_self, _ = multi_head_attention(lp["self_attn"], x, x, x, dec_mask, heads, d_k, d_v)
    a = pallas_add_layernorm(q_self.reshape(-1, D), x.reshape(-1, D),
                             lp["ln1_g"], lp["ln1_b"]).reshape(B, T, D)
    mid, attn = multi_head_attention(lp["ctx_attn"], a, memory_bank, memory_bank,
                                     src_pad_mask, heads, d_k, d_v)
    b = pallas_add_layernorm(mid.reshape(-1, D), a.reshape(-1, D),
                             lp["ln2_g"], lp["ln2_b"]).reshape(B, T, D)
    out = pallas_ffn(b.reshape(-1, D), lp["ffn"]).reshape(B, T, D)
    return out, attn


def decoder_forward(params, memory_bank, memory_len, tgt_pad_mask, tgt_emb,
                    gnn=None, lengths_node=None):
    """Equivalent of Decoder.forward (use_seq=True, use_gnn=False, eval mode)."""
    del gnn, lengths_node  # TODO(synk): gnn cross-attention branch not implemented.
    B, T, D = tgt_emb.shape
    S = memory_bank.shape[1]
    # init_state: src pad mask from memory_len (True = masked position)
    src_mask = jnp.arange(S, dtype=jnp.int32)[None, :] >= memory_len[:, None]
    src_pad_mask = jnp.broadcast_to(src_mask[:, None, :], (B, T, S))
    # self-attention mask: target pad OR future position
    subsequent = jnp.triu(jnp.ones((T, T), dtype=bool), k=1)
    dec_mask = tgt_pad_mask[:, None, :] | subsequent[None, :, :]

    x = tgt_emb.astype(jnp.float32)
    representations, attentions = [], []
    for lp in params["layers"]:
        x, attn = decoder_layer_forward(lp, x, memory_bank.astype(jnp.float32),
                                        src_pad_mask, dec_mask,
                                        params["heads"], params["d_k"], params["d_v"])
        representations.append(x)
        attentions.append(attn)
    return representations, {"std": attentions, "coverage": None}


# --------------------------- plain-JAX reference ------------------------------

def _ref_mha(p, query, key, value, mask, heads, d_k, d_v):
    B, Tq, D = query.shape
    Tk = key.shape[1]
    q = (query.reshape(-1, D) @ p["wq"] + p["bq"]).reshape(B, Tq, heads, d_k).transpose(0, 2, 1, 3)
    k = (key.reshape(-1, D) @ p["wk"] + p["bk"]).reshape(B, Tk, heads, d_k).transpose(0, 2, 1, 3)
    v = (value.reshape(-1, D) @ p["wv"] + p["bv"]).reshape(B, Tk, heads, d_v).transpose(0, 2, 1, 3)
    q = q * (1.0 / math.sqrt(d_k))
    s = jnp.einsum("bhqd,bhkd->bhqk", q, k)
    s = jnp.where(mask[:, None, :, :], NEG_INF, s)
    a = jax.nn.softmax(s, axis=-1)
    ctx = jnp.einsum("bhqk,bhkd->bhqd", a, v).transpose(0, 2, 1, 3).reshape(B * Tq, heads * d_v)
    out = (ctx @ p["wo"] + p["bo"]).reshape(B, Tq, D)
    return out, a


def _ref_add_ln(x, r, g, b):
    h = x + r
    mu = jnp.mean(h, axis=-1, keepdims=True)
    var = jnp.mean(jnp.square(h - mu), axis=-1, keepdims=True)
    return (h - mu) * lax.rsqrt(var + LN_EPS) * g + b


def _ref_ffn(x, fp):
    mu = jnp.mean(x, axis=-1, keepdims=True)
    var = jnp.mean(jnp.square(x - mu), axis=-1, keepdims=True)
    h = (x - mu) * lax.rsqrt(var + LN_EPS) * fp["ln_g"] + fp["ln_b"]
    inter = jnp.maximum(h @ fp["w1"] + fp["b1"], 0.0)
    return x + (inter @ fp["w2"] + fp["b2"])


def ref_decoder_forward(params, memory_bank, memory_len, tgt_pad_mask, tgt_emb):
    B, T, D = tgt_emb.shape
    S = memory_bank.shape[1]
    src_mask = jnp.arange(S, dtype=jnp.int32)[None, :] >= memory_len[:, None]
    src_pad_mask = jnp.broadcast_to(src_mask[:, None, :], (B, T, S))
    subsequent = jnp.triu(jnp.ones((T, T), dtype=bool), k=1)
    dec_mask = tgt_pad_mask[:, None, :] | subsequent[None, :, :]

    x = tgt_emb.astype(jnp.float32)
    reps, attns = [], []
    for lp in params["layers"]:
        h, d_k, d_v = params["heads"], params["d_k"], params["d_v"]
        q_self, _ = _ref_mha(lp["self_attn"], x, x, x, dec_mask, h, d_k, d_v)
        a = _ref_add_ln(q_self, x, lp["ln1_g"], lp["ln1_b"])
        mid, attn = _ref_mha(lp["ctx_attn"], a, memory_bank, memory_bank, src_pad_mask, h, d_k, d_v)
        b = _ref_add_ln(mid, a, lp["ln2_g"], lp["ln2_b"])
        x = _ref_ffn(b, lp["ffn"])
        reps.append(x)
        attns.append(attn)
    return reps, attns


# ---------------------------------- main --------------------------------------

if __name__ == "__main__":
    B, T, S = 2, 8, 16            # batch, tgt len, memory (src) len
    d_model, heads, d_k, d_v, d_ff, nlayers = 32, 2, 16, 16, 64, 2

    key = jax.random.PRNGKey(0)
    kp, km, ke = jax.random.split(key, 3)
    params = init_decoder_params(kp, nlayers, d_model, heads, d_k, d_v, d_ff)

    memory_bank = jax.random.normal(km, (B, S, d_model), jnp.float32)
    tgt_emb = jax.random.normal(ke, (B, T, d_model), jnp.float32)
    memory_len = jnp.array([S, 10], dtype=jnp.int32)
    tgt_len = jnp.array([T, 5], dtype=jnp.int32)
    tgt_pad_mask = jnp.arange(T, dtype=jnp.int32)[None, :] >= tgt_len[:, None]  # True = pad

    outs, attns = decoder_forward(params, memory_bank, memory_len, tgt_pad_mask, tgt_emb)
    outs = jax.block_until_ready(outs)
    attns = jax.block_until_ready(attns)

    ref_outs, ref_attns = ref_decoder_forward(params, memory_bank, memory_len,
                                              tgt_pad_mask, tgt_emb)

    assert len(outs) == nlayers and len(attns["std"]) == nlayers
    for o, r in zip(outs, ref_outs):
        assert o.shape == (B, T, d_model)
        assert jnp.allclose(o, r, atol=1e-3, rtol=1e-3), "layer representation mismatch"
    for a, r in zip(attns["std"], ref_attns):
        assert a.shape == (B, heads, T, S)
        assert jnp.allclose(a, r, atol=1e-4, rtol=1e-3), "cross-attention mismatch"

    print("KERNEL_OK")
</pallas_src>

<mosaic_0001>
module attributes {stable_mosaic.version = 11 : i64} {
  func.func @_linear_kernel(%arg0: i32, %arg1: memref<16x32xf32, #tpu.memory_space<vmem>>, %arg2: memref<32x32xf32, #tpu.memory_space<vmem>>, %arg3: memref<1x32xf32, #tpu.memory_space<vmem>>, %arg4: memref<16x32xf32, #tpu.memory_space<vmem>>) attributes {dimension_semantics = [#tpu.dimension_semantics<parallel>], iteration_bounds = array<i64: 1>, scalar_prefetch = 0 : i64, scratch_operands = 0 : i64, tpu.core_type = #tpu.core_type<tc>, window_params = [{transform_indices = @transform_0, window_bounds = array<i64: 16, 32>}, {pipeline_mode = #tpu.pipeline_mode<synchronous>, transform_indices = @transform_1, window_bounds = array<i64: 32, 32>}, {pipeline_mode = #tpu.pipeline_mode<synchronous>, transform_indices = @transform_2, window_bounds = array<i64: 1, 32>}, {transform_indices = @transform_3, window_bounds = array<i64: 16, 32>}]} {
    %c0 = arith.constant 0 : index
    %c0_0 = arith.constant 0 : index
    %0 = vector.load %arg1[%c0, %c0_0] : memref<16x32xf32, #tpu.memory_space<vmem>>, vector<16x32xf32>
    %c0_1 = arith.constant 0 : index
    %c0_2 = arith.constant 0 : index
    %1 = vector.load %arg2[%c0_1, %c0_2] : memref<32x32xf32, #tpu.memory_space<vmem>>, vector<32x32xf32>
    %cst = arith.constant dense<0.000000e+00> : vector<16x32xf32>
    %2 = tpu.matmul %0, %1, %cst {dimension_numbers = #tpu.dot_dimension_numbers<[1], [0], [0], [1], [0, 0, 1, 1], [], []>} : vector<16x32xf32>, vector<32x32xf32>, vector<16x32xf32> -> vector<16x32xf32>
    %c0_3 = arith.constant 0 : index
    %c0_4 = arith.constant 0 : index
    %3 = vector.load %arg3[%c0_3, %c0_4] : memref<1x32xf32, #tpu.memory_space<vmem>>, vector<1x32xf32>
    %4 = vector.broadcast %3 : vector<1x32xf32> to vector<16x32xf32>
    %5 = arith.addf %2, %4 : vector<16x32xf32>
    %c0_5 = arith.constant 0 : index
    %c0_6 = arith.constant 0 : index
    %6 = vector.load %arg4[%c0_5, %c0_6] : memref<16x32xf32, #tpu.memory_space<vmem>>, vector<16x32xf32>
    tpu.vector_store %arg4[%c0_5, %c0_6], %5 {strides = array<i32>} : memref<16x32xf32, #tpu.memory_space<vmem>>, vector<16x32xf32>,
    return
  }
  func.func @transform_0(%arg0: i32) -> (i32, i32) {
    %c0_i32 = arith.constant 0 : i32
    %c0_i32_0 = arith.constant 0 : i32
    return %arg0, %c0_i32 : i32, i32
  }
  func.func @transform_1(%arg0: i32) -> (i32, i32) {
    %c0_i32 = arith.constant 0 : i32
    %c0_i32_0 = arith.constant 0 : i32
    %c0_i32_1 = arith.constant 0 : i32
    return %c0_i32, %c0_i32_0 : i32, i32
  }
  func.func @transform_2(%arg0: i32) -> (i32, i32) {
    %c0_i32 = arith.constant 0 : i32
    %c0_i32_0 = arith.constant 0 : i32
    %c0_i32_1 = arith.constant 0 : i32
    return %c0_i32, %c0_i32_0 : i32, i32
  }
  func.func @transform_3(%arg0: i32) -> (i32, i32) {
    %c0_i32 = arith.constant 0 : i32
    %c0_i32_0 = arith.constant 0 : i32
    return %arg0, %c0_i32 : i32, i32
  }
}

</mosaic_0001>

<llo_original>
// kernel: tpu_custom_call.1
$region0: #{tpu_custom_call.1}
  #allocation0 [shape = 'u32[]', space=smem, size = 0x4, offset = 0x4, fixed_abs, tag = 'smem constant byte address 0x4 - core index']
  #allocation1 [shape = 'u32[72,128]{1,0:T(1,128)}', space=vmem, size = 0x9000, scoped, tag = 'internal scratch']
  %s0 = inlined_call_operand.hbm [shape: f32[16,32], index: 0, kind: input, shape index: {}]
  %s1 = inlined_call_operand.hbm [shape: f32[32,32], index: 1, kind: input, shape index: {}]
  %s2 = inlined_call_operand.vmem [shape: f32[1,32], index: 2, kind: input, shape index: {}]
  %s3 = inlined_call_operand.hbm [shape: f32[16,32], index: 3, kind: output, shape index: {}]
  %s4 = sld [smem:[#allocation0]]
  $region30: #{tpu_custom_call.1} parent=0
    _
  %s6 = ssub.s32 1, %s4
  %s7 = scalar_select 0, %s6, %s4
  $region1: #{tpu_custom_call.1} parent=0
    #allocation2 [shape = 'u8[8192]{0}', space=vmem, size = 0x2000, scoped, tag = 'input window, operand 0, single buffered']
    #allocation3 [shape = 's32[1]{0}', space=sflag, size = 0x4, scoped, tag = 'scoped memory for tpu_custom_call.1']
    #allocation4 [shape = 's32[1]{0}', space=sflag, size = 0x4, scoped, tag = 'scoped memory for tpu_custom_call.1']
    #allocation5 [shape = 'u8[16384]{0}', space=vmem, size = 0x4000, scoped, tag = 'input window, operand 1, single buffered']
    #allocation6 [shape = 's32[1]{0}', space=sflag, size = 0x4, scoped, tag = 'scoped memory for tpu_custom_call.1']
    #allocation7 [shape = 'u8[8192]{0}', space=vmem, size = 0x2000, scoped, tag = 'output window, operand 0, single buffered']
    %8 = vsyncpa [#allocation3], 0
    %9 = vsyncpa [#allocation6], 0
    %10 = vsyncpa [#allocation4], 0
    // Predicated region
    $region2: #{tpu_custom_call.1} parent=1 // pred_check
      _
    $region3: #{tpu_custom_call.1} parent=1 // pred_check_branch
      %12 = sbr.rel (0) target = $region5
    $region4: #{tpu_custom_call.1} parent=1 // pred_region
      %14 = vsyncadd [#allocation3], 0
      %s15 = sshll.u32 %s0, 4
      %s16 = int_to_ptr.hbm [resolvable:$true] %s15
      %s17 = sshll.u32 [#allocation2], 4
      %s18 = int_to_ptr.vmem [resolvable:$true] %s17
      %23 = dma.hbm_to_vmem [thread:$0]  %s16, 256, %s18, [#allocation3], 128, 128, 8
    $region5: #{tpu_custom_call.1} parent=1 // pred_fallthru
      _
    // Predicated region
    $region6: #{tpu_custom_call.1} parent=1 // pred_check
      _
    $region7: #{tpu_custom_call.1} parent=1 // pred_check_branch
      %25 = sbr.rel (0) target = $region9
    $region8: #{tpu_custom_call.1} parent=1 // pred_region
      %27 = vsyncadd [#allocation6], 0
      %s28 = sshll.u32 %s1, 4
      %s29 = int_to_ptr.hbm [resolvable:$true] %s28
      %s30 = sshll.u32 [#allocation5], 4
      %s31 = int_to_ptr.vmem [resolvable:$true] %s30
      %36 = dma.hbm_to_vmem [thread:$0]  %s29, 512, %s31, [#allocation6], 128, 128, 8
    $region9: #{tpu_custom_call.1} parent=1 // pred_fallthru
      _
    // Predicated region
    $region10: #{tpu_custom_call.1} parent=1 // pred_check
      _
    $region11: #{tpu_custom_call.1} parent=1 // pred_check_branch
      %38 = sbr.rel (0) target = $region13
    $region12: #{tpu_custom_call.1} parent=1 // pred_region
      _
    $region13: #{tpu_custom_call.1} parent=1 // pred_fallthru
      _
    // Predicated region
    $region14: #{tpu_custom_call.1} parent=1 // pred_check
      _
    $region15: #{tpu_custom_call.1} parent=1 // pred_check_branch
      %40 = sbr.rel (0) target = $region17
    $region16: #{tpu_custom_call.1} parent=1 // pred_region
      %42 = dma.done [#allocation3], 256
    $region17: #{tpu_custom_call.1} parent=1 // pred_fallthru
      _
    // Predicated region
    $region18: #{tpu_custom_call.1} parent=1 // pred_check
      _
    $region19: #{tpu_custom_call.1} parent=1 // pred_check_branch
      %44 = sbr.rel (0) target = $region21
    $region20: #{tpu_custom_call.1} parent=1 // pred_region
      %46 = dma.done [#allocation6], 512
    $region21: #{tpu_custom_call.1} parent=1 // pred_fallthru
      _
    %v47 = vld [vmem:[#allocation2] sm:$0xff]
    %v48 = vld [vmem:[#allocation2 + $0x8] sm:$0xff]
    %v49 = vld [vmem:[#allocation5] sm:$0xff]
    %v50 = vld [vmem:[#allocation5 + $0x8] sm:$0xff]
    %v51 = vld [vmem:[#allocation5 + $0x10] sm:$0xff]
    %v52 = vld [vmem:[#allocation5 + $0x18] sm:$0xff]
    %v53 = vld [vmem:[%s2] sm:$0x1]
    %v55 = vperm.slane %v53, 0
    %vm57 = vcmask 261120
    %v59 = vsel %vm57, %v47, 0
    %v62 = vsel %vm57, %v48, 0
    %64 = vmatpush.msra.mxu0 0.0
    %65 = vmatpush.msra.mxu0 0.0
    %66 = vmatpush.msra.mxu0 0.0
    %67 = vmatpush.msra.mxu0 0.0
    %68 = vmatpush.msra.mxu0 0.0
    %69 = vmatpush.msra.mxu0 0.0
    %70 = vmatpush.msra.mxu0 0.0
    %71 = vmatpush.msra.mxu0 0.0
    %72 = vmatpush.msra.mxu0 0.0
    %73 = vmatpush.msra.mxu0 0.0
    %74 = vmatpush.msra.mxu0 0.0
    %75 = vmatpush.msra.mxu0 0.0
    %76 = vmatpush.msra.mxu0 %v52
    %77 = vmatpush.msra.mxu0 %v51
    %78 = vmatpush.msra.mxu0 %v50
    %79 = vmatpush.msra.mxu0 %v49
    %80 = vmatmul.f32.gmra.mxu0 %v59
    %v81 = vpop.f32.mrf.mxu0
    %v82 = vadd.f32 %v55, %v81
    %83 = vmatmul.f32.gmra.mxu0 %v62
    %v84 = vpop.f32.mrf.mxu0
    %v85 = vadd.f32 %v55, %v84
    %86 = vdwg.mxu0
    %87 = vst.msk [vmem:[#allocation7] sm:$0xff] %vm57, %v82
    %88 = vst.msk [vmem:[#allocation7 + $0x8] sm:$0xff] %vm57, %v85
    // Predicated region
    $region22: #{tpu_custom_call.1} parent=1 // pred_check
      _
    $region23: #{tpu_custom_call.1} parent=1 // pred_check_branch
      %90 = sbr.rel (0) target = $region25
    $region24: #{tpu_custom_call.1} parent=1 // pred_region
      %92 = vsyncadd [#allocation4], 0
      %s93 = sshll.u32 [#allocation7], 4
      %s94 = int_to_ptr.vmem [resolvable:$true] %s93
      %s95 = sshll.u32 %s3, 4
      %s96 = int_to_ptr.hbm [resolvable:$true] %s95
      %101 = dma.vmem_to_hbm [thread:$0]  %s94, 256, %s96, [#allocation4], 128, 128, 8
    $region25: #{tpu_custom_call.1} parent=1 // pred_fallthru
      _
    // Predicated region
    $region26: #{tpu_custom_call.1} parent=1 // pred_check
      _
    $region27: #{tpu_custom_call.1} parent=1 // pred_check_branch
      %103 = sbr.rel (0) target = $region29
    $region28: #{tpu_custom_call.1} parent=1 // pred_region
      %105 = dma.done [#allocation4], 256
    $region29: #{tpu_custom_call.1} parent=1 // pred_fallthru
      _
    %106 = vsyncpa [#allocation3], 1
    %107 = vsyncpa [#allocation6], 1
    %108 = vsyncpa [#allocation4], 1

</llo_original>
